<compile_context>
chip_gen: v7x
topology: tpu7x:2x2x1
jax: 0.10.0
libtpu: 0.0.40
codegen_flags: <defaults>
</compile_context>

<pallas_src>
import functools

import jax
import jax.numpy as jnp
from jax.experimental import pallas as pl
from jax.experimental.pallas import tpu as pltpu


def _adain_kernel(x_ref, w_ref, b_ref, o_ref, *, eps, tile_rows):
    # x_ref / o_ref: (tile_rows, L) block; w_ref / b_ref: full (N_pad, 1).
    r0 = pl.multiple_of(pl.program_id(0) * tile_rows, tile_rows)

    x = x_ref[...].astype(jnp.float32)

    # Two-pass (centered) statistics: biased variance, matching
    # F.batch_norm(training=True); keeps numerical robustness.
    mean = jnp.mean(x, axis=-1, keepdims=True)                # XLU lane reduce
    centered = x - mean
    var = jnp.mean(centered * centered, axis=-1, keepdims=True)

    w = w_ref[pl.ds(r0, tile_rows), :]
    b = b_ref[pl.ds(r0, tile_rows), :]
    scale = jax.lax.rsqrt(var + eps) * w                      # per-row, rsqrt on EUP

    o_ref[...] = (centered * scale + b).astype(o_ref.dtype)   # 2 full-tile VALU ops


def adaptive_instance_norm_2d(x, weight, bias, eps=1e-5, target_block_bytes=2 << 20):
    """x: (B, C, H, W); weight, bias: (B*C,) — as assigned before AdaIN call."""
    B, C, H, W = x.shape
    N = B * C
    L = H * W

    itemsize = jnp.dtype(x.dtype).itemsize
    # Sublane packing: f32 -> 8 rows/vreg, bf16 -> 16, int8/fp8 -> 32.
    row_pack = {4: 8, 2: 16, 1: 32}.get(itemsize, 8)

    # Rows per block: fill ~target_block_bytes, but leave >=2 grid steps when
    # there is enough work so the pipeline can double-buffer / shard cores.
    rows_cap = max(row_pack,
                   (target_block_bytes // max(1, L * itemsize)) // row_pack * row_pack)
    n_rounded = pl.cdiv(N, row_pack) * row_pack
    tile_rows = min(rows_cap, n_rounded)
    if n_rounded >= 2 * row_pack:
        half = max(row_pack, pl.cdiv(N, 2 * row_pack) * row_pack)
        tile_rows = min(tile_rows, half)

    n_pad = pl.cdiv(N, tile_rows) * tile_rows
    grid = n_pad // tile_rows

    x2d = x.reshape(N, L)
    w2d = weight.reshape(N, 1).astype(jnp.float32)
    b2d = bias.reshape(N, 1).astype(jnp.float32)
    if n_pad != N:
        pad = n_pad - N
        x2d = jnp.pad(x2d, ((0, pad), (0, 0)))   # zero rows: var=0, rsqrt(eps) finite
        w2d = jnp.pad(w2d, ((0, pad), (0, 0)))
        b2d = jnp.pad(b2d, ((0, pad), (0, 0)))

    # Explicit VMEM budget: double-buffered x + out blocks, resident w/b
    # (lane-padded footprint), f32 temporaries inside the body, plus slack.
    block_bytes = tile_rows * L * itemsize
    wb_vmem = pl.cdiv(n_pad, 8) * 8 * 128 * 4
    vmem_limit = (2 * 2 * block_bytes
                  + 2 * 2 * wb_vmem
                  + 3 * tile_rows * L * 4
                  + (2 << 20))
    vmem_limit = int(min(max(vmem_limit, 16 << 20), 48 << 20))  # safe on v5e/v6e/v7x

    cost = pl.CostEstimate(
        flops=5 * N * L,
        transcendentals=N,
        bytes_accessed=2 * N * L * itemsize + 2 * N * 4,
    )

    kernel = functools.partial(_adain_kernel, eps=float(eps), tile_rows=tile_rows)

    # TODO(synk): for spatial sizes where H*W is not a multiple of 128 (e.g. 7x7),
    # regroup/pad the lane axis in the wrapper to keep output stores lane-dense.
    out2d = pl.pallas_call(
        kernel,
        out_shape=jax.ShapeDtypeStruct((n_pad, L), x.dtype),
        grid_spec=pltpu.PrefetchScalarGridSpec(
            num_scalar_prefetch=0,
            grid=(grid,),
            in_specs=[
                pl.BlockSpec((tile_rows, L), lambda i: (i, 0)),
                # weight / bias: whole array resident in VMEM, fetched once.
                pl.BlockSpec((n_pad, 1), lambda i: (0, 0)),
                pl.BlockSpec((n_pad, 1), lambda i: (0, 0)),
            ],
            out_specs=pl.BlockSpec((tile_rows, L), lambda i: (i, 0)),
        ),
        compiler_params=pltpu.CompilerParams(
            dimension_semantics=("parallel",),
            vmem_limit_bytes=vmem_limit,
        ),
        cost_estimate=cost,
    )(x2d, w2d, b2d)

    return out2d[:N].reshape(B, C, H, W)


def _reference(x, weight, bias, eps=1e-5):
    B, C, H, W = x.shape
    xr = x.reshape(B * C, H * W).astype(jnp.float32)
    mean = xr.mean(axis=-1, keepdims=True)
    var = ((xr - mean) ** 2).mean(axis=-1, keepdims=True)
    out = (xr - mean) / jnp.sqrt(var + eps)
    out = out * weight.reshape(-1, 1) + bias.reshape(-1, 1)
    return out.reshape(B, C, H, W).astype(x.dtype)


if __name__ == "__main__":
    B, C, H, W = 2, 4, 16, 16
    num_features = C

    key = jax.random.PRNGKey(0)
    kx, kw, kb = jax.random.split(key, 3)

    x = jax.random.normal(kx, (B, C, H, W), dtype=jnp.float32)
    # In the original module, weight/bias are assigned externally (e.g. by a
    # style MLP) with shape (B * num_features,).
    weight = jax.random.normal(kw, (B * num_features,), dtype=jnp.float32) * 0.5 + 1.0
    bias = jax.random.normal(kb, (B * num_features,), dtype=jnp.float32) * 0.1
    # running_mean / running_var buffers exist in the module but do not affect
    # the training-mode forward output.
    running_mean = jnp.zeros((num_features,), jnp.float32)  # noqa: F841
    running_var = jnp.ones((num_features,), jnp.float32)    # noqa: F841

    out = adaptive_instance_norm_2d(x, weight, bias, eps=1e-5)
    out = jax.block_until_ready(out)

    ref = _reference(x, weight, bias, eps=1e-5)
    assert out.shape == (B, C, H, W)
    assert jnp.allclose(out, ref, atol=1e-4, rtol=1e-4), "mismatch vs reference"

    print("KERNEL_OK")
</pallas_src>

<mosaic_0001>
module attributes {stable_mosaic.version = 11 : i64} {
  func.func @_adain_kernel(%arg0: i32, %arg1: memref<8x256xf32, #tpu.memory_space<vmem>>, %arg2: memref<8x1xf32, #tpu.memory_space<vmem>>, %arg3: memref<8x1xf32, #tpu.memory_space<vmem>>, %arg4: memref<8x256xf32, #tpu.memory_space<vmem>>) attributes {dimension_semantics = [#tpu.dimension_semantics<parallel>], iteration_bounds = array<i64: 1>, scalar_prefetch = 0 : i64, scratch_operands = 0 : i64, tpu.core_type = #tpu.core_type<tc>, window_params = [{transform_indices = @transform_0, window_bounds = array<i64: 8, 256>}, {pipeline_mode = #tpu.pipeline_mode<synchronous>, transform_indices = @transform_1, window_bounds = array<i64: 8, 1>}, {pipeline_mode = #tpu.pipeline_mode<synchronous>, transform_indices = @transform_2, window_bounds = array<i64: 8, 1>}, {transform_indices = @transform_3, window_bounds = array<i64: 8, 256>}]} {
    %c8_i32 = arith.constant 8 : i32
    %0 = arith.muli %arg0, %c8_i32 : i32
    %1 = tpu.assume_multiple %0, 8 : i32
    %c0 = arith.constant 0 : index
    %c0_0 = arith.constant 0 : index
    %2 = vector.load %arg1[%c0, %c0_0] : memref<8x256xf32, #tpu.memory_space<vmem>>, vector<8x256xf32>
    %cst = arith.constant dense<0.000000e+00> : vector<8xf32>
    %3 = vector.multi_reduction <add>, %2, %cst [1] : vector<8x256xf32> to vector<8xf32>
    %4 = vector.shape_cast %3 : vector<8xf32> to vector<8x1xf32>
    %cst_1 = arith.constant 2.560000e+02 : f32
    %5 = vector.broadcast %cst_1 : f32 to vector<8x1xf32>
    %6 = arith.divf %4, %5 : vector<8x1xf32>
    %7 = vector.broadcast %6 : vector<8x1xf32> to vector<8x256xf32>
    %8 = arith.subf %2, %7 : vector<8x256xf32>
    %9 = arith.mulf %8, %8 : vector<8x256xf32>
    %cst_2 = arith.constant dense<0.000000e+00> : vector<8xf32>
    %10 = vector.multi_reduction <add>, %9, %cst_2 [1] : vector<8x256xf32> to vector<8xf32>
    %11 = vector.shape_cast %10 : vector<8xf32> to vector<8x1xf32>
    %cst_3 = arith.constant 2.560000e+02 : f32
    %12 = vector.broadcast %cst_3 : f32 to vector<8x1xf32>
    %13 = arith.divf %11, %12 : vector<8x1xf32>
    %14 = arith.index_cast %1 : i32 to index
    %c0_4 = arith.constant 0 : index
    %15 = vector.load %arg2[%14, %c0_4] : memref<8x1xf32, #tpu.memory_space<vmem>>, vector<8x1xf32>
    %16 = arith.index_cast %1 : i32 to index
    %c0_5 = arith.constant 0 : index
    %17 = vector.load %arg3[%16, %c0_5] : memref<8x1xf32, #tpu.memory_space<vmem>>, vector<8x1xf32>
    %cst_6 = arith.constant 9.99999974E-6 : f32
    %18 = vector.broadcast %cst_6 : f32 to vector<8x1xf32>
    %19 = arith.addf %13, %18 : vector<8x1xf32>
    %20 = math.rsqrt %19 : vector<8x1xf32>
    %21 = arith.mulf %20, %15 : vector<8x1xf32>
    %22 = vector.broadcast %21 : vector<8x1xf32> to vector<8x256xf32>
    %23 = arith.mulf %8, %22 : vector<8x256xf32>
    %24 = vector.broadcast %17 : vector<8x1xf32> to vector<8x256xf32>
    %25 = arith.addf %23, %24 : vector<8x256xf32>
    %c0_7 = arith.constant 0 : index
    %c0_8 = arith.constant 0 : index
    %26 = vector.load %arg4[%c0_7, %c0_8] : memref<8x256xf32, #tpu.memory_space<vmem>>, vector<8x256xf32>
    tpu.vector_store %arg4[%c0_7, %c0_8], %25 {strides = array<i32>} : memref<8x256xf32, #tpu.memory_space<vmem>>, vector<8x256xf32>,
    return
  }
  func.func @transform_0(%arg0: i32) -> (i32, i32) {
    %c0_i32 = arith.constant 0 : i32
    %c0_i32_0 = arith.constant 0 : i32
    return %arg0, %c0_i32 : i32, i32
  }
  func.func @transform_1(%arg0: i32) -> (i32, i32) {
    %c0_i32 = arith.constant 0 : i32
    %c0_i32_0 = arith.constant 0 : i32
    %c0_i32_1 = arith.constant 0 : i32
    return %c0_i32, %c0_i32_0 : i32, i32
  }
  func.func @transform_2(%arg0: i32) -> (i32, i32) {
    %c0_i32 = arith.constant 0 : i32
    %c0_i32_0 = arith.constant 0 : i32
    %c0_i32_1 = arith.constant 0 : i32
    return %c0_i32, %c0_i32_0 : i32, i32
  }
  func.func @transform_3(%arg0: i32) -> (i32, i32) {
    %c0_i32 = arith.constant 0 : i32
    %c0_i32_0 = arith.constant 0 : i32
    return %arg0, %c0_i32 : i32, i32
  }
}

</mosaic_0001>

<llo_original>
// kernel: tpu_custom_call.1
$region0: #{tpu_custom_call.1}
  #allocation0 [shape = 'u32[]', space=smem, size = 0x4, offset = 0x4, fixed_abs, tag = 'smem constant byte address 0x4 - core index']
  #allocation1 [shape = 'u32[144,128]{1,0:T(1,128)}', space=vmem, size = 0x12000, scoped, tag = 'internal scratch']
  %s0 = inlined_call_operand.vmem [shape: f32[8,256], index: 0, kind: input, shape index: {}]
  %s1 = inlined_call_operand.vmem [shape: f32[8,1], index: 1, kind: input, shape index: {}]
  %s2 = inlined_call_operand.vmem [shape: f32[8,1], index: 2, kind: input, shape index: {}]
  %s3 = inlined_call_operand.hbm [shape: f32[8,256], index: 3, kind: output, shape index: {}]
  %s4 = sld [smem:[#allocation0]]
  $region22: #{tpu_custom_call.1} parent=0
    _
  %s6 = ssub.s32 1, %s4
  %s7 = scalar_select 0, %s6, %s4
  $region1: #{tpu_custom_call.1} parent=0
    #allocation2 [shape = 'u8[8192]{0}', space=vmem, size = 0x2000, scoped, tag = 'output window, operand 0, single buffered']
    #allocation3 [shape = 's32[1]{0}', space=sflag, size = 0x4, scoped, tag = 'scoped memory for tpu_custom_call.1']
    %8 = vsyncpa [#allocation3], 0
    // Predicated region
    $region2: #{tpu_custom_call.1} parent=1 // pred_check
      _
    $region3: #{tpu_custom_call.1} parent=1 // pred_check_branch
      %10 = sbr.rel (0) target = $region5
    $region4: #{tpu_custom_call.1} parent=1 // pred_region
      _
    $region5: #{tpu_custom_call.1} parent=1 // pred_fallthru
      _
    // Predicated region
    $region6: #{tpu_custom_call.1} parent=1 // pred_check
      _
    $region7: #{tpu_custom_call.1} parent=1 // pred_check_branch
      %12 = sbr.rel (0) target = $region9
    $region8: #{tpu_custom_call.1} parent=1 // pred_region
      _
    $region9: #{tpu_custom_call.1} parent=1 // pred_fallthru
      _
    // Predicated region
    $region10: #{tpu_custom_call.1} parent=1 // pred_check
      _
    $region11: #{tpu_custom_call.1} parent=1 // pred_check_branch
      %14 = sbr.rel (0) target = $region13
    $region12: #{tpu_custom_call.1} parent=1 // pred_region
      _
    $region13: #{tpu_custom_call.1} parent=1 // pred_fallthru
      _
    %s15 = smul.u32 0, 8
    %v16 = vld [vmem:[%s0] sm:$0xff]
    %v17 = vld [vmem:[%s0 + $0x8] sm:$0xff]
    %v18 = vadd.f32 %v16, %v17
    %19 = vadd.xlane.f32.xlu0 %v18
    %v20 = vpop.xlane.xlu0 %19
    %v21 = vrcp.pop 256.0
    %v22 = vmul.f32 %v20, %v21
    %v23 = vsub.f32 %v16, %v22
    %v24 = vsub.f32 %v17, %v22
    %v25 = vmul.f32 %v23, %v23
    %v26 = vmul.f32 %v24, %v24
    %v27 = vadd.f32 %v25, %v26
    %28 = vadd.xlane.f32.xlu0 %v27
    %v29 = vpop.xlane.xlu0 %28
    %v30 = vmul.f32 %v29, %v21
    %s31 = scalar_lea.vmem %s1, %s15
    %v32 = vld [vmem:[%s31] sm:$0xff]
    %s33 = scalar_lea.vmem %s2, %s15
    %v34 = vld [vmem:[%s33] sm:$0xff]
    %v35 = vadd.f32 %v30, 1e-05
    %v36 = vrsqrt.pop %v35
    %v37 = vmul.f32 %v36, %v32
    %39 = vset.pattern.permute.xlu0 0
    %40 = vperm.xlu0 %39, %v37
    %v41 = vpop.permute.xlu0 %40
    %v43 = vmul.f32 %v23, %v41
    %v44 = vmul.f32 %v24, %v41
    %46 = vset.pattern.permute.xlu0 0
    %47 = vperm.xlu0 %46, %v34
    %v48 = vpop.permute.xlu0 %47
    %v50 = vadd.f32 %v43, %v48
    %v51 = vadd.f32 %v44, %v48
    %52 = vst [vmem:[#allocation2] sm:$0xff] %v50
    %53 = vst [vmem:[#allocation2 + $0x8] sm:$0xff] %v51
    // Predicated region
    $region14: #{tpu_custom_call.1} parent=1 // pred_check
      _
    $region15: #{tpu_custom_call.1} parent=1 // pred_check_branch
      %55 = sbr.rel (0) target = $region17
    $region16: #{tpu_custom_call.1} parent=1 // pred_region
      %s57 = ssub.s32 256, 256
      %58 = vsyncadd [#allocation3], %s57
      %s60 = sshll.u32 [#allocation2], 4
      %s61 = int_to_ptr.vmem [resolvable:$true] %s60
      %63 = dma.vmem_to_hbm [thread:$0]  %s61, 256, %s3, [#allocation3]
    $region17: #{tpu_custom_call.1} parent=1 // pred_fallthru
      _
    // Predicated region
    $region18: #{tpu_custom_call.1} parent=1 // pred_check
      _
    $region19: #{tpu_custom_call.1} parent=1 // pred_check_branch
      %65 = sbr.rel (0) target = $region21
    $region20: #{tpu_custom_call.1} parent=1 // pred_region
      %66 = dma.done [#allocation3], 256
    $region21: #{tpu_custom_call.1} parent=1 // pred_fallthru
      _
    %67 = vsyncpa [#allocation3], 1

</llo_original>
